<compile_context>
chip_gen: v6e
topology: v6e:2x2x1
jax: 0.10.0
libtpu: 0.0.40
codegen_flags: <defaults>
</compile_context>

<pallas_src>
import jax
import jax.numpy as jnp
from jax.experimental import pallas as pl
from jax.experimental.pallas import tpu as pltpu

_NLANE = 128
_TK_MAX = 32768  # 32K * 32 * 2B = 2 MiB per w1 buffer (4 MiB double-buffered)


def _round_up(x, m):
    return ((x + m - 1) // m) * m


def _disc_kernel(x_ref, w1_ref, b1_ref, w2_ref, b2_ref, w3_ref, b3_ref,
                 a1_ref, a2_ref, o_ref, acc_ref):
    k = pl.program_id(0)

    @pl.when(k == 0)
    def _init():
        acc_ref[...] = jnp.zeros_like(acc_ref)

    # Streamed partial product of layer_1 over the K (feature) axis.
    # bf16 x bf16 -> f32 accumulate on the MXU.
    acc_ref[...] += jnp.dot(x_ref[...], w1_ref[...],
                            preferred_element_type=jnp.float32)

    @pl.when(k == pl.num_programs(0) - 1)
    def _epilogue():
        a1 = a1_ref[0]                               # PReLU shared alpha (SMEM)
        a2 = a2_ref[0]

        # layer_1 epilogue: bias -> PReLU -> Sigmoid
        h1 = acc_ref[...] + b1_ref[...]              # (B, H) + (1, H)
        h1 = jnp.where(h1 > 0, h1, a1 * h1)
        h1 = jax.nn.sigmoid(h1)

        # layer_2: Linear -> PReLU
        h2 = jnp.dot(h1, w2_ref[...],
                     preferred_element_type=jnp.float32) + b2_ref[...]
        h2 = jnp.where(h2 > 0, h2, a2 * h2)

        # layer_3: Linear (output head padded to 128 lanes; wrapper slices)
        out = jnp.dot(h2, w3_ref[...],
                      preferred_element_type=jnp.float32) + b3_ref[...]
        o_ref[...] = out.astype(o_ref.dtype)


def feature_block_discriminator4(x4, params, *, tk=None):
    """x4: (B, C, H, W) float32.  params: dict of weights (already transposed)."""
    B = x4.shape[0]
    d0 = x4.shape[1] * x4.shape[2] * x4.shape[3]
    x_flat = x4.reshape(B, d0)                       # == torch .view(-1, C*H*W)

    w1, b1, a1 = params["w1"], params["b1"], params["a1"]
    w2, b2, a2 = params["w2"], params["b2"], params["a2"]
    w3, b3 = params["w3"], params["b3"]
    hdim = w1.shape[1]
    n_out = w3.shape[1]

    # ---- K tile selection (multiple of 128, capped so VMEM stays small) ----
    if tk is None:
        tk = min(_TK_MAX, _round_up(d0, _NLANE))
    tk = _round_up(tk, _NLANE)
    d0_pad = _round_up(d0, tk)
    nk = d0_pad // tk

    # ---- Stream the heavy layer-1 operands in bf16 (zero-pad K remainder) ----
    x_p = jnp.zeros((B, d0_pad), jnp.bfloat16)
    x_p = x_p.at[:, :d0].set(x_flat.astype(jnp.bfloat16))
    w1_p = jnp.zeros((d0_pad, hdim), jnp.bfloat16)
    w1_p = w1_p.at[:d0, :].set(w1.astype(jnp.bfloat16))

    # ---- Lane-dense padded output head (extra columns are exact zeros) ----
    n_out_pad = _round_up(n_out, _NLANE)
    w3_p = jnp.zeros((hdim, n_out_pad), jnp.float32).at[:, :n_out].set(w3)
    b3_p = jnp.zeros((1, n_out_pad), jnp.float32).at[:, :n_out].set(b3)

    grid_spec = pltpu.PrefetchScalarGridSpec(
        num_scalar_prefetch=0,
        grid=(nk,),
        in_specs=[
            pl.BlockSpec((B, tk), lambda k: (0, k)),            # x   (bf16 stream)
            pl.BlockSpec((tk, hdim), lambda k: (k, 0)),         # w1  (bf16 stream)
            pl.BlockSpec((1, hdim), lambda k: (0, 0)),          # b1  (resident)
            pl.BlockSpec((hdim, hdim), lambda k: (0, 0)),       # w2  (resident)
            pl.BlockSpec((1, hdim), lambda k: (0, 0)),          # b2  (resident)
            pl.BlockSpec((hdim, n_out_pad), lambda k: (0, 0)),  # w3  (resident, padded)
            pl.BlockSpec((1, n_out_pad), lambda k: (0, 0)),     # b3  (resident, padded)
            pl.BlockSpec(memory_space=pltpu.SMEM),              # a1  (PReLU scalar)
            pl.BlockSpec(memory_space=pltpu.SMEM),              # a2  (PReLU scalar)
        ],
        out_specs=pl.BlockSpec((B, n_out_pad), lambda k: (0, 0)),
        scratch_shapes=[pltpu.VMEM((B, hdim), jnp.float32)],    # layer-1 accumulator
    )

    out_padded = pl.pallas_call(
        _disc_kernel,
        out_shape=jax.ShapeDtypeStruct((B, n_out_pad), jnp.float32),
        grid_spec=grid_spec,
        compiler_params=pltpu.CompilerParams(
            dimension_semantics=("arbitrary",)),                # K is a reduction axis
    )(x_p, w1_p, b1, w2, b2, w3_p, b3_p, a1, a2)

    return out_padded[:, :n_out]


def init_params(key, in_features, input_nc, n_classes=2):
    """Deterministic synthetic parameter init (PyTorch-Linear-like scaling)."""
    ks = jax.random.split(key, 6)

    def lin(kw, kb, fan_in, fan_out):
        bound = 1.0 / jnp.sqrt(fan_in)
        # stored as (in, out), i.e. transpose of torch's (out, in)
        w = jax.random.uniform(kw, (fan_in, fan_out), jnp.float32, -bound, bound)
        b = jax.random.uniform(kb, (1, fan_out), jnp.float32, -bound, bound)
        return w, b

    w1, b1 = lin(ks[0], ks[1], in_features, input_nc)
    w2, b2 = lin(ks[2], ks[3], input_nc, input_nc)
    w3, b3 = lin(ks[4], ks[5], input_nc, n_classes)
    # PReLU default: single shared parameter initialized to 0.25
    a1 = jnp.full((1,), 0.25, jnp.float32)
    a2 = jnp.full((1,), 0.25, jnp.float32)
    return dict(w1=w1, b1=b1, a1=a1, w2=w2, b2=b2, a2=a2, w3=w3, b3=b3)


def _reference(x4, p):
    """Pure-JAX reference reproducing the PyTorch forward (bf16 layer-1 inputs,
    f32 accumulation, matching the kernel's streamed-weight numerics)."""
    B = x4.shape[0]
    x = x4.reshape(B, -1)
    h1 = jnp.dot(x.astype(jnp.bfloat16), p["w1"].astype(jnp.bfloat16),
                 preferred_element_type=jnp.float32) + p["b1"]
    h1 = jnp.where(h1 > 0, h1, p["a1"][0] * h1)
    h1 = jax.nn.sigmoid(h1)
    h2 = h1 @ p["w2"] + p["b2"]
    h2 = jnp.where(h2 > 0, h2, p["a2"][0] * h2)
    return h2 @ p["w3"] + p["b3"]


if __name__ == "__main__":
    # Small shapes consistent with the module: batch=2, channels=4, spatial=16x16
    B, C, H, W = 2, 4, 16, 16
    input_nc = 32
    in_features = C * H * W  # stands in for 306432 in the original module

    key = jax.random.PRNGKey(0)
    kx, kp = jax.random.split(key)
    x4 = jax.random.normal(kx, (B, C, H, W), jnp.float32)
    params = init_params(kp, in_features, input_nc)

    # tk=512 -> 2 grid steps on the toy shapes, exercising the K-accumulation
    # path; at the real 306432 features the default tk (32768 bf16 stream)
    # applies.
    out = feature_block_discriminator4(x4, params, tk=512)
    out = jax.block_until_ready(out)

    ref = _reference(x4, params)
    assert out.shape == (B, 2), out.shape
    assert jnp.allclose(out, ref, atol=1e-3, rtol=1e-3), (out, ref)
    print("KERNEL_OK")
</pallas_src>

<mosaic_0001>
module attributes {stable_mosaic.version = 11 : i64} {
  func.func @_disc_kernel(%arg0: i32, %arg1: memref<2x512xbf16, #tpu.memory_space<vmem>>, %arg2: memref<512x32xbf16, #tpu.memory_space<vmem>>, %arg3: memref<1x32xf32, #tpu.memory_space<vmem>>, %arg4: memref<32x32xf32, #tpu.memory_space<vmem>>, %arg5: memref<1x32xf32, #tpu.memory_space<vmem>>, %arg6: memref<32x128xf32, #tpu.memory_space<vmem>>, %arg7: memref<1x128xf32, #tpu.memory_space<vmem>>, %arg8: memref<1xf32, #tpu.memory_space<smem>>, %arg9: memref<1xf32, #tpu.memory_space<smem>>, %arg10: memref<2x128xf32, #tpu.memory_space<vmem>>, %arg11: memref<2x32xf32, #tpu.memory_space<vmem>>) attributes {dimension_semantics = [#tpu.dimension_semantics<arbitrary>], iteration_bounds = array<i64: 2>, scalar_prefetch = 0 : i64, scratch_operands = 1 : i64, tpu.core_type = #tpu.core_type<tc>, window_params = [{transform_indices = @transform_0, window_bounds = array<i64: 2, 512>}, {transform_indices = @transform_1, window_bounds = array<i64: 512, 32>}, {pipeline_mode = #tpu.pipeline_mode<synchronous>, transform_indices = @transform_2, window_bounds = array<i64: 1, 32>}, {pipeline_mode = #tpu.pipeline_mode<synchronous>, transform_indices = @transform_3, window_bounds = array<i64: 32, 32>}, {pipeline_mode = #tpu.pipeline_mode<synchronous>, transform_indices = @transform_4, window_bounds = array<i64: 1, 32>}, {pipeline_mode = #tpu.pipeline_mode<synchronous>, transform_indices = @transform_5, window_bounds = array<i64: 32, 128>}, {pipeline_mode = #tpu.pipeline_mode<synchronous>, transform_indices = @transform_6, window_bounds = array<i64: 1, 128>}, {transform_indices = @transform_7, window_bounds = array<i64: 1>}, {transform_indices = @transform_8, window_bounds = array<i64: 1>}, {pipeline_mode = #tpu.pipeline_mode<synchronous>, transform_indices = @transform_9, window_bounds = array<i64: 2, 128>}]} {
    %c0_i32 = arith.constant 0 : i32
    %0 = arith.cmpi eq, %arg0, %c0_i32 : i32
    %1 = arith.extui %0 : i1 to i32
    %c0_i32_0 = arith.constant 0 : i32
    %2 = arith.cmpi ne, %1, %c0_i32_0 : i32
    scf.if %2 {
      %cst_9 = arith.constant 0.000000e+00 : f32
      %12 = vector.broadcast %cst_9 : f32 to vector<2x32xf32>
      %c0_10 = arith.constant 0 : index
      %c0_11 = arith.constant 0 : index
      %13 = vector.load %arg11[%c0_10, %c0_11] : memref<2x32xf32, #tpu.memory_space<vmem>>, vector<2x32xf32>
      tpu.vector_store %arg11[%c0_10, %c0_11], %12 {strides = array<i32>} : memref<2x32xf32, #tpu.memory_space<vmem>>, vector<2x32xf32>,
    } else {
    }
    %c0 = arith.constant 0 : index
    %c0_1 = arith.constant 0 : index
    %3 = vector.load %arg11[%c0, %c0_1] : memref<2x32xf32, #tpu.memory_space<vmem>>, vector<2x32xf32>
    %c0_2 = arith.constant 0 : index
    %c0_3 = arith.constant 0 : index
    %4 = vector.load %arg1[%c0_2, %c0_3] : memref<2x512xbf16, #tpu.memory_space<vmem>>, vector<2x512xbf16>
    %c0_4 = arith.constant 0 : index
    %c0_5 = arith.constant 0 : index
    %5 = vector.load %arg2[%c0_4, %c0_5] : memref<512x32xbf16, #tpu.memory_space<vmem>>, vector<512x32xbf16>
    %cst = arith.constant dense<0.000000e+00> : vector<2x32xf32>
    %6 = tpu.matmul %4, %5, %cst {dimension_numbers = #tpu.dot_dimension_numbers<[1], [0], [0], [1], [0, 0, 1, 1], [], []>} : vector<2x512xbf16>, vector<512x32xbf16>, vector<2x32xf32> -> vector<2x32xf32>
    %7 = arith.addf %3, %6 : vector<2x32xf32>
    %c0_6 = arith.constant 0 : index
    %c0_7 = arith.constant 0 : index
    %8 = vector.load %arg11[%c0_6, %c0_7] : memref<2x32xf32, #tpu.memory_space<vmem>>, vector<2x32xf32>
    tpu.vector_store %arg11[%c0_6, %c0_7], %7 {strides = array<i32>} : memref<2x32xf32, #tpu.memory_space<vmem>>, vector<2x32xf32>,
    %c1_i32 = arith.constant 1 : i32
    %9 = arith.cmpi eq, %arg0, %c1_i32 : i32
    %10 = arith.extui %9 : i1 to i32
    %c0_i32_8 = arith.constant 0 : i32
    %11 = arith.cmpi ne, %10, %c0_i32_8 : i32
    scf.if %11 {
      %c0_9 = arith.constant 0 : index
      %12 = memref.load %arg8[%c0_9] : memref<1xf32, #tpu.memory_space<smem>>
      %c0_10 = arith.constant 0 : index
      %13 = memref.load %arg9[%c0_10] : memref<1xf32, #tpu.memory_space<smem>>
      %c0_11 = arith.constant 0 : index
      %c0_12 = arith.constant 0 : index
      %14 = vector.load %arg11[%c0_11, %c0_12] : memref<2x32xf32, #tpu.memory_space<vmem>>, vector<2x32xf32>
      %c0_13 = arith.constant 0 : index
      %c0_14 = arith.constant 0 : index
      %15 = vector.load %arg3[%c0_13, %c0_14] : memref<1x32xf32, #tpu.memory_space<vmem>>, vector<1x32xf32>
      %16 = vector.broadcast %15 : vector<1x32xf32> to vector<2x32xf32>
      %17 = arith.addf %14, %16 : vector<2x32xf32>
      %cst_15 = arith.constant 0.000000e+00 : f32
      %18 = vector.broadcast %cst_15 : f32 to vector<2x32xf32>
      %19 = arith.cmpf ogt, %17, %18 : vector<2x32xf32>
      %20 = vector.broadcast %12 : f32 to vector<2x32xf32>
      %21 = arith.mulf %20, %17 : vector<2x32xf32>
      %22 = arith.select %19, %17, %21 : vector<2x32xi1>, vector<2x32xf32>
      %23 = arith.negf %22 : vector<2x32xf32>
      %24 = math.exp %23 : vector<2x32xf32>
      %cst_16 = arith.constant 1.000000e+00 : f32
      %25 = vector.broadcast %cst_16 : f32 to vector<2x32xf32>
      %26 = arith.addf %25, %24 : vector<2x32xf32>
      %27 = arith.divf %25, %26 : vector<2x32xf32>
      %c0_17 = arith.constant 0 : index
      %c0_18 = arith.constant 0 : index
      %28 = vector.load %arg4[%c0_17, %c0_18] : memref<32x32xf32, #tpu.memory_space<vmem>>, vector<32x32xf32>
      %cst_19 = arith.constant dense<0.000000e+00> : vector<2x32xf32>
      %29 = tpu.matmul %27, %28, %cst_19 {dimension_numbers = #tpu.dot_dimension_numbers<[1], [0], [0], [1], [0, 0, 1, 1], [], []>} : vector<2x32xf32>, vector<32x32xf32>, vector<2x32xf32> -> vector<2x32xf32>
      %c0_20 = arith.constant 0 : index
      %c0_21 = arith.constant 0 : index
      %30 = vector.load %arg5[%c0_20, %c0_21] : memref<1x32xf32, #tpu.memory_space<vmem>>, vector<1x32xf32>
      %31 = vector.broadcast %30 : vector<1x32xf32> to vector<2x32xf32>
      %32 = arith.addf %29, %31 : vector<2x32xf32>
      %cst_22 = arith.constant 0.000000e+00 : f32
      %33 = vector.broadcast %cst_22 : f32 to vector<2x32xf32>
      %34 = arith.cmpf ogt, %32, %33 : vector<2x32xf32>
      %35 = vector.broadcast %13 : f32 to vector<2x32xf32>
      %36 = arith.mulf %35, %32 : vector<2x32xf32>
      %37 = arith.select %34, %32, %36 : vector<2x32xi1>, vector<2x32xf32>
      %c0_23 = arith.constant 0 : index
      %c0_24 = arith.constant 0 : index
      %38 = vector.load %arg6[%c0_23, %c0_24] : memref<32x128xf32, #tpu.memory_space<vmem>>, vector<32x128xf32>
      %cst_25 = arith.constant dense<0.000000e+00> : vector<2x128xf32>
      %39 = tpu.matmul %37, %38, %cst_25 {dimension_numbers = #tpu.dot_dimension_numbers<[1], [0], [0], [1], [0, 0, 1, 1], [], []>} : vector<2x32xf32>, vector<32x128xf32>, vector<2x128xf32> -> vector<2x128xf32>
      %c0_26 = arith.constant 0 : index
      %c0_27 = arith.constant 0 : index
      %40 = vector.load %arg7[%c0_26, %c0_27] : memref<1x128xf32, #tpu.memory_space<vmem>>, vector<1x128xf32>
      %41 = vector.broadcast %40 : vector<1x128xf32> to vector<2x128xf32>
      %42 = arith.addf %39, %41 : vector<2x128xf32>
      %c0_28 = arith.constant 0 : index
      %c0_29 = arith.constant 0 : index
      %43 = vector.load %arg10[%c0_28, %c0_29] : memref<2x128xf32, #tpu.memory_space<vmem>>, vector<2x128xf32>
      tpu.vector_store %arg10[%c0_28, %c0_29], %42 {strides = array<i32>} : memref<2x128xf32, #tpu.memory_space<vmem>>, vector<2x128xf32>,
    } else {
    }
    return
  }
  func.func @transform_0(%arg0: i32) -> (i32, i32) {
    %c0_i32 = arith.constant 0 : i32
    %c0_i32_0 = arith.constant 0 : i32
    return %c0_i32, %arg0 : i32, i32
  }
  func.func @transform_1(%arg0: i32) -> (i32, i32) {
    %c0_i32 = arith.constant 0 : i32
    %c0_i32_0 = arith.constant 0 : i32
    return %arg0, %c0_i32 : i32, i32
  }
  func.func @transform_2(%arg0: i32) -> (i32, i32) {
    %c0_i32 = arith.constant 0 : i32
    %c0_i32_0 = arith.constant 0 : i32
    %c0_i32_1 = arith.constant 0 : i32
    return %c0_i32, %c0_i32_0 : i32, i32
  }
  func.func @transform_3(%arg0: i32) -> (i32, i32) {
    %c0_i32 = arith.constant 0 : i32
    %c0_i32_0 = arith.constant 0 : i32
    %c0_i32_1 = arith.constant 0 : i32
    return %c0_i32, %c0_i32_0 : i32, i32
  }
  func.func @transform_4(%arg0: i32) -> (i32, i32) {
    %c0_i32 = arith.constant 0 : i32
    %c0_i32_0 = arith.constant 0 : i32
    %c0_i32_1 = arith.constant 0 : i32
    return %c0_i32, %c0_i32_0 : i32, i32
  }
  func.func @transform_5(%arg0: i32) -> (i32, i32) {
    %c0_i32 = arith.constant 0 : i32
    %c0_i32_0 = arith.constant 0 : i32
    %c0_i32_1 = arith.constant 0 : i32
    return %c0_i32, %c0_i32_0 : i32, i32
  }
  func.func @transform_6(%arg0: i32) -> (i32, i32) {
    %c0_i32 = arith.constant 0 : i32
    %c0_i32_0 = arith.constant 0 : i32
    %c0_i32_1 = arith.constant 0 : i32
    return %c0_i32, %c0_i32_0 : i32, i32
  }
  func.func @transform_7(%arg0: i32) -> i32 {
    %c0_i32 = arith.constant 0 : i32
    %c0_i32_0 = arith.constant 0 : i32
    return %c0_i32 : i32
  }
  func.func @transform_8(%arg0: i32) -> i32 {
    %c0_i32 = arith.constant 0 : i32
    %c0_i32_0 = arith.constant 0 : i32
    return %c0_i32 : i32
  }
  func.func @transform_9(%arg0: i32) -> (i32, i32) {
    %c0_i32 = arith.constant 0 : i32
    %c0_i32_0 = arith.constant 0 : i32
    %c0_i32_1 = arith.constant 0 : i32
    return %c0_i32, %c0_i32_0 : i32, i32
  }
}

</mosaic_0001>

<llo_original>
// kernel: tpu_custom_call.1
$region0: #{tpu_custom_call.1}
  #allocation0 [shape = 'u32[]', space=smem, size = 0x4, offset = 0x4, fixed_abs, tag = 'smem constant byte address 0x4 - core index']
  #allocation1 [shape = 'u32[144,128]{1,0:T(1,128)}', space=vmem, size = 0x12000, scoped, tag = 'internal scratch']
  #allocation2 [shape = 'f32[2,32]{1,0:T(2,128)}', space=vmem, size = 0x400, scoped, tag = 'scratch operand']
  #allocation3 [shape = 'f32[1]{0:T(128)S(6)}', space=smem, size = 0x200, scoped, tag = 'scoped memory for tpu_custom_call.1']
  #allocation4 [shape = 'f32[1]{0:T(128)S(6)}', space=smem, size = 0x200, scoped, tag = 'scoped memory for tpu_custom_call.1']
  %s0 = inlined_call_operand.vmem [shape: bf16[2,1024], index: 0, kind: input, shape index: {}]
  %s1 = inlined_call_operand.vmem [shape: bf16[1024,32], index: 1, kind: input, shape index: {}]
  %s2 = inlined_call_operand.vmem [shape: f32[1,32], index: 2, kind: input, shape index: {}]
  %s3 = inlined_call_operand.vmem [shape: f32[32,32], index: 3, kind: input, shape index: {}]
  %s4 = inlined_call_operand.vmem [shape: f32[1,32], index: 4, kind: input, shape index: {}]
  %s5 = inlined_call_operand.vmem [shape: f32[32,128], index: 5, kind: input, shape index: {}]
  %s6 = inlined_call_operand.vmem [shape: f32[1,128], index: 6, kind: input, shape index: {}]
  %s7 = inlined_call_operand.<no memory space> [shape: f32[1], index: 7, kind: input, shape index: {}]
  %s8 = inlined_call_operand.<no memory space> [shape: f32[1], index: 8, kind: input, shape index: {}]
  %s9 = inlined_call_operand.hbm [shape: f32[2,128], index: 9, kind: output, shape index: {}]
  %s10 = sld [smem:[#allocation0]]
  $region77: #{tpu_custom_call.1} parent=0
    _
  %s12 = ssub.s32 1, %s10
  %s13 = scalar_select 0, %s12, %s10
  %14 = sst [smem:[#allocation3]] %s7
  %15 = sst [smem:[#allocation4]] %s8
  $region1: #{tpu_custom_call.1} parent=0
    #allocation5 [shape = 'u8[1024]{0}', space=vmem, size = 0x400, scoped, tag = 'output window, operand 0, single buffered']
    #allocation6 [shape = 's32[2]{0}', space=sflag, size = 0x8, scoped, tag = 'scoped memory for tpu_custom_call.1']
    %16 = vsyncpa [#allocation6], 0
    loop: start=0, step=1, limit=4
    $region2: #{tpu_custom_call.1} parent=1 // loop_pre_header
      _
    $region3: #{tpu_custom_call.1} parent=1 // loop_header
      %s18 = sphi 0, %s22
      %p19 = scmp.ge.s32.totalorder %s18, 4
      %s28 = sphi 0, %s30
      %s31 = sphi 0, %s28
      %s32 = sphi 0, %s31
      %s48 = sphi 0, %s32
      %s54 = sphi 0, %s56
      %s57 = sphi 0, %s54
      %s58 = sphi 0, %s57
      %s74 = sphi 0, %s58
      %s78 = sphi 0, %s78
      %s80 = sphi 0, %s78
      %s81 = sphi 0, %s80
      %s95 = sphi 0, %s81
      %s99 = sphi 0, %s99
      %s101 = sphi 0, %s99
      %s102 = sphi 0, %s101
      %s116 = sphi 0, %s102
      %s120 = sphi 0, %s120
      %s122 = sphi 0, %s120
      %s123 = sphi 0, %s122
      %s137 = sphi 0, %s123
      %s141 = sphi 0, %s141
      %s143 = sphi 0, %s141
      %s144 = sphi 0, %s143
      %s158 = sphi 0, %s144
      %s162 = sphi 0, %s162
      %s164 = sphi 0, %s162
      %s165 = sphi 0, %s164
      %s179 = sphi 0, %s165
      %s183 = sphi 0, %s183
      %s185 = sphi 0, %s183
      %s186 = sphi 0, %s185
      %s200 = sphi 0, %s186
      %s204 = sphi 0, %s204
      %s206 = sphi 0, %s204
      %s207 = sphi 0, %s206
      %s221 = sphi 0, %s207
      %s225 = sphi 0, %s225
      %s227 = sphi 0, %s225
      %s228 = sphi 0, %s227
      %s242 = sphi 0, %s228
    $region4: #{tpu_custom_call.1} parent=1 // loop_header_branch
      %21 = sbr.rel (%p19) target = $region8
    $region5: #{tpu_custom_call.1} parent=1 // loop_body
      %s23 = ssub.s32 %s18, 1
      %s24 = ssub.s32 %s18, 2
      %s25 = sadd.s32 %s18, 1
      %s26 = ssub.s32 %s18, %s25
      %p27 = scmp.eq.s32.totalorder %s26, 0
      %s29 = sadd.s32 %s28, 1
      %s30 = scalar_select %p27, %s28, %s29
      %p33 = pneg %p27
      %p34 = scmp.eq.s32.totalorder %s18, 1
      %p35 = por %p33, %p34
      %p36 = scmp.ne.s32.totalorder %s28, %s31
      %p37 = scmp.eq.s32.totalorder %s18, 0
      %p38 = por %p36, %p37
      %p39 = scmp.ne.s32.totalorder %s28, %s31
      %p40 = scmp.eq.s32.totalorder %s23, 1
      %p41 = por %p39, %p40
      %p42 = scmp.ne.s32.totalorder %s31, %s32
      %p43 = scmp.eq.s32.totalorder %s23, 0
      %p44 = por %p42, %p43
      %p45 = scmp.ne.s32.totalorder %s31, %s32
      %p46 = scmp.eq.s32.totalorder %s24, 1
      %p47 = por %p45, %p46
      %p49 = scmp.ne.s32.totalorder %s32, %s48
      %p50 = scmp.eq.s32.totalorder %s24, 0
      %p51 = por %p49, %p50
      %s52 = ssub.s32 %s18, %s25
      %p53 = scmp.eq.s32.totalorder %s52, 0
      %s55 = sadd.s32 %s54, 1
      %s56 = scalar_select %p53, %s54, %s55
      %p59 = pneg %p53
      %p60 = scmp.eq.s32.totalorder %s18, 1
      %p61 = por %p59, %p60
      %p62 = scmp.ne.s32.totalorder %s54, %s57
      %p63 = scmp.eq.s32.totalorder %s18, 0
      %p64 = por %p62, %p63
      %p65 = scmp.ne.s32.totalorder %s54, %s57
      %p66 = scmp.eq.s32.totalorder %s23, 1
      %p67 = por %p65, %p66
      %p68 = scmp.ne.s32.totalorder %s57, %s58
      %p69 = scmp.eq.s32.totalorder %s23, 0
      %p70 = por %p68, %p69
      %p71 = scmp.ne.s32.totalorder %s57, %s58
      %p72 = scmp.eq.s32.totalorder %s24, 1
      %p73 = por %p71, %p72
      %p75 = scmp.ne.s32.totalorder %s58, %s74
      %p76 = scmp.eq.s32.totalorder %s24, 0
      %p77 = por %p75, %p76
      %s79 = sadd.s32 %s78, 1
      %p82 = scmp.eq.s32.totalorder %s18, 1
      %p83 = scmp.ne.s32.totalorder %s78, %s80
      %p84 = scmp.eq.s32.totalorder %s18, 0
      %p85 = por %p83, %p84
      %p86 = scmp.ne.s32.totalorder %s78, %s80
      %p87 = scmp.eq.s32.totalorder %s23, 1
      %p88 = por %p86, %p87
      %p89 = scmp.ne.s32.totalorder %s80, %s81
      %p90 = scmp.eq.s32.totalorder %s23, 0
      %p91 = por %p89, %p90
      %p92 = scmp.ne.s32.totalorder %s80, %s81
      %p93 = scmp.eq.s32.totalorder %s24, 1
      %p94 = por %p92, %p93
      %p96 = scmp.ne.s32.totalorder %s81, %s95
      %p97 = scmp.eq.s32.totalorder %s24, 0
      %p98 = por %p96, %p97
      %s100 = sadd.s32 %s99, 1
      %p103 = scmp.eq.s32.totalorder %s18, 1
      %p104 = scmp.ne.s32.totalorder %s99, %s101
      %p105 = scmp.eq.s32.totalorder %s18, 0
      %p106 = por %p104, %p105
      %p107 = scmp.ne.s32.totalorder %s99, %s101
      %p108 = scmp.eq.s32.totalorder %s23, 1
      %p109 = por %p107, %p108
      %p110 = scmp.ne.s32.totalorder %s101, %s102
      %p111 = scmp.eq.s32.totalorder %s23, 0
      %p112 = por %p110, %p111
      %p113 = scmp.ne.s32.totalorder %s101, %s102
      %p114 = scmp.eq.s32.totalorder %s24, 1
      %p115 = por %p113, %p114
      %p117 = scmp.ne.s32.totalorder %s102, %s116
      %p118 = scmp.eq.s32.totalorder %s24, 0
      %p119 = por %p117, %p118
      %s121 = sadd.s32 %s120, 1
      %p124 = scmp.eq.s32.totalorder %s18, 1
      %p125 = scmp.ne.s32.totalorder %s120, %s122
      %p126 = scmp.eq.s32.totalorder %s18, 0
      %p127 = por %p125, %p126
      %p128 = scmp.ne.s32.totalorder %s120, %s122
      %p129 = scmp.eq.s32.totalorder %s23, 1
      %p130 = por %p128, %p129
      %p131 = scmp.ne.s32.totalorder %s122, %s123
      %p132 = scmp.eq.s32.totalorder %s23, 0
      %p133 = por %p131, %p132
      %p134 = scmp.ne.s32.totalorder %s122, %s123
      %p135 = scmp.eq.s32.totalorder %s24, 1
      %p136 = por %p134, %p135
      %p138 = scmp.ne.s32.totalorder %s123, %s137
      %p139 = scmp.eq.s32.totalorder %s24, 0
      %p140 = por %p138, %p139
      %s142 = sadd.s32 %s141, 1
      %p145 = scmp.eq.s32.totalorder %s18, 1
      %p146 = scmp.ne.s32.totalorder %s141, %s143
      %p147 = scmp.eq.s32.totalorder %s18, 0
      %p148 = por %p146, %p147
      %p149 = scmp.ne.s32.totalorder %s141, %s143
      %p150 = scmp.eq.s32.totalorder %s23, 1
      %p151 = por %p149, %p150
      %p152 = scmp.ne.s32.totalorder %s143, %s144
      %p153 = scmp.eq.s32.totalorder %s23, 0
      %p154 = por %p152, %p153
      %p155 = scmp.ne.s32.totalorder %s143, %s144
      %p156 = scmp.eq.s32.totalorder %s24, 1
      %p157 = por %p155, %p156
      %p159 = scmp.ne.s32.totalorder %s144, %s158
      %p160 = scmp.eq.s32.totalorder %s24, 0
      %p161 = por %p159, %p160
      %s163 = sadd.s32 %s162, 1
      %p166 = scmp.eq.s32.totalorder %s18, 1
      %p167 = scmp.ne.s32.totalorder %s162, %s164
      %p168 = scmp.eq.s32.totalorder %s18, 0
      %p169 = por %p167, %p168
      %p170 = scmp.ne.s32.totalorder %s162, %s164
      %p171 = scmp.eq.s32.totalorder %s23, 1
      %p172 = por %p170, %p171
      %p173 = scmp.ne.s32.totalorder %s164, %s165
      %p174 = scmp.eq.s32.totalorder %s23, 0
      %p175 = por %p173, %p174
      %p176 = scmp.ne.s32.totalorder %s164, %s165
      %p177 = scmp.eq.s32.totalorder %s24, 1
      %p178 = por %p176, %p177
      %p180 = scmp.ne.s32.totalorder %s165, %s179
      %p181 = scmp.eq.s32.totalorder %s24, 0
      %p182 = por %p180, %p181
      %s184 = sadd.s32 %s183, 1
      %p187 = scmp.eq.s32.totalorder %s18, 1
      %p188 = scmp.ne.s32.totalorder %s183, %s185
      %p189 = scmp.eq.s32.totalorder %s18, 0
      %p190 = por %p188, %p189
      %p191 = scmp.ne.s32.totalorder %s183, %s185
      %p192 = scmp.eq.s32.totalorder %s23, 1
      %p193 = por %p191, %p192
      %p194 = scmp.ne.s32.totalorder %s185, %s186
      %p195 = scmp.eq.s32.totalorder %s23, 0
      %p196 = por %p194, %p195
      %p197 = scmp.ne.s32.totalorder %s185, %s186
      %p198 = scmp.eq.s32.totalorder %s24, 1
      %p199 = por %p197, %p198
      %p201 = scmp.ne.s32.totalorder %s186, %s200
      %p202 = scmp.eq.s32.totalorder %s24, 0
      %p203 = por %p201, %p202
      %s205 = sadd.s32 %s204, 1
      %p208 = scmp.eq.s32.totalorder %s18, 1
      %p209 = scmp.ne.s32.totalorder %s204, %s206
      %p210 = scmp.eq.s32.totalorder %s18, 0
      %p211 = por %p209, %p210
      %p212 = scmp.ne.s32.totalorder %s204, %s206
      %p213 = scmp.eq.s32.totalorder %s23, 1
      %p214 = por %p212, %p213
      %p215 = scmp.ne.s32.totalorder %s206, %s207
      %p216 = scmp.eq.s32.totalorder %s23, 0
      %p217 = por %p215, %p216
      %p218 = scmp.ne.s32.totalorder %s206, %s207
      %p219 = scmp.eq.s32.totalorder %s24, 1
      %p220 = por %p218, %p219
      %p222 = scmp.ne.s32.totalorder %s207, %s221
      %p223 = scmp.eq.s32.totalorder %s24, 0
      %p224 = por %p222, %p223
      %s226 = sadd.s32 %s225, 1
      %p229 = scmp.eq.s32.totalorder %s18, 1
      %p230 = scmp.ne.s32.totalorder %s225, %s227
      %p231 = scmp.eq.s32.totalorder %s18, 0
      %p232 = por %p230, %p231
      %p233 = scmp.ne.s32.totalorder %s225, %s227
      %p234 = scmp.eq.s32.totalorder %s23, 1
      %p235 = por %p233, %p234
      %p236 = scmp.ne.s32.totalorder %s227, %s228
      %p237 = scmp.eq.s32.totalorder %s23, 0
      %p238 = por %p236, %p237
      %p239 = scmp.ne.s32.totalorder %s227, %s228
      %p240 = scmp.eq.s32.totalorder %s24, 1
      %p241 = por %p239, %p240
      %p243 = scmp.ne.s32.totalorder %s228, %s242
      %p244 = scmp.eq.s32.totalorder %s24, 0
      %p245 = por %p243, %p244
      %p246 = scmp.le.s32.totalorder 1, %s18
      %p247 = scmp.lt.s32.totalorder %s18, 3
      %p248 = pnand %p246, %p247
      %p249 = pneg %p248
      // Predicated region
      $region9: #{tpu_custom_call.1} parent=5 // pred_check
        _
      $region10: #{tpu_custom_call.1} parent=5 // pred_check_branch
        %251 = sbr.rel (%p248) target = $region12
      $region11: #{tpu_custom_call.1} parent=5 // pred_region
        %s252 = ssub.s32 %s18, 1
        // Predicated region
        $region13: #{tpu_custom_call.1} parent=11 // pred_check
          %p253 = pneg %p91
        $region14: #{tpu_custom_call.1} parent=11 // pred_check_branch
          %255 = sbr.rel (%p253) target = $region16
        $region15: #{tpu_custom_call.1} parent=11 // pred_region
          _
        $region16: #{tpu_custom_call.1} parent=11 // pred_fallthru
          _
        // Predicated region
        $region17: #{tpu_custom_call.1} parent=11 // pred_check
          %p256 = pneg %p112
        $region18: #{tpu_custom_call.1} parent=11 // pred_check_branch
          %258 = sbr.rel (%p256) target = $region20
        $region19: #{tpu_custom_call.1} parent=11 // pred_region
          _
        $region20: #{tpu_custom_call.1} parent=11 // pred_fallthru
          _
        // Predicated region
        $region21: #{tpu_custom_call.1} parent=11 // pred_check
          %p259 = pneg %p133
        $region22: #{tpu_custom_call.1} parent=11 // pred_check_branch
          %261 = sbr.rel (%p259) target = $region24
        $region23: #{tpu_custom_call.1} parent=11 // pred_region
          _
        $region24: #{tpu_custom_call.1} parent=11 // pred_fallthru
          _
        // Predicated region
        $region25: #{tpu_custom_call.1} parent=11 // pred_check
          %p262 = pneg %p154
        $region26: #{tpu_custom_call.1} parent=11 // pred_check_branch
          %264 = sbr.rel (%p262) target = $region28
        $region27: #{tpu_custom_call.1} parent=11 // pred_region
          _
        $region28: #{tpu_custom_call.1} parent=11 // pred_fallthru
          _
        // Predicated region
        $region29: #{tpu_custom_call.1} parent=11 // pred_check
          %p265 = pneg %p175
        $region30: #{tpu_custom_call.1} parent=11 // pred_check_branch
          %267 = sbr.rel (%p265) target = $region32
        $region31: #{tpu_custom_call.1} parent=11 // pred_region
          _
        $region32: #{tpu_custom_call.1} parent=11 // pred_fallthru
          _
        // Predicated region
        $region33: #{tpu_custom_call.1} parent=11 // pred_check
          %p268 = pneg %p196
        $region34: #{tpu_custom_call.1} parent=11 // pred_check_branch
          %270 = sbr.rel (%p268) target = $region36
        $region35: #{tpu_custom_call.1} parent=11 // pred_region
          _
        $region36: #{tpu_custom_call.1} parent=11 // pred_fallthru
          _
        // Predicated region
        $region37: #{tpu_custom_call.1} parent=11 // pred_check
          %p271 = pneg %p217
        $region38: #{tpu_custom_call.1} parent=11 // pred_check_branch
          %273 = sbr.rel (%p271) target = $region40
        $region39: #{tpu_custom_call.1} parent=11 // pred_region
          _
        $region40: #{tpu_custom_call.1} parent=11 // pred_fallthru
          _
      $region12: #{tpu_custom_call.1} parent=5 // pred_fallthru
        _
      %p274 = scmp.lt.s32.totalorder %s18, 2
      // Predicated region
      $region41: #{tpu_custom_call.1} parent=5 // pred_check
        %p275 = pneg %p274
      $region42: #{tpu_custom_call.1} parent=5 // pred_check_branch
        %277 = sbr.rel (%p275) target = $region44
      $region43: #{tpu_custom_call.1} parent=5 // pred_region
        // Predicated region
        $region45: #{tpu_custom_call.1} parent=43 // pred_check
          %p278 = pneg %p38
        $region46: #{tpu_custom_call.1} parent=43 // pred_check_branch
          %280 = sbr.rel (%p278) target = $region48
        $region47: #{tpu_custom_call.1} parent=43 // pred_region
          %s281 = smul.u32 4, %s18
          %p282 = scmp.lt.s32.totalorder %s281, 7
          %s283 = scalar_select %p282, %s281, 7
          %s284 = scalar_lea.vmem %s0, %s283
          %s285 = smul.u32 4, %s18
        $region48: #{tpu_custom_call.1} parent=43 // pred_fallthru
          _
        // Predicated region
        $region49: #{tpu_custom_call.1} parent=43 // pred_check
          %p286 = pneg %p64
        $region50: #{tpu_custom_call.1} parent=43 // pred_check_branch
          %288 = sbr.rel (%p286) target = $region52
        $region51: #{tpu_custom_call.1} parent=43 // pred_region
          %s289 = smul.u32 64, %s18
          %p290 = scmp.lt.s32.totalorder %s289, 127
          %s291 = scalar_select %p290, %s289, 127
          %s292 = smul.addr %s291, 4
          %s293 = scalar_lea.vmem %s1, %s292
          %s294 = smul.u32 64, %s18
        $region52: #{tpu_custom_call.1} parent=43 // pred_fallthru
          _
      $region44: #{tpu_custom_call.1} parent=5 // pred_fallthru
        _
      %p295 = scmp.le.s32.totalorder 1, %s18
      %p296 = scmp.lt.s32.totalorder %s18, 3
      %p297 = pnand %p295, %p296
      %p298 = pneg %p297
      // Predicated region
      $region53: #{tpu_custom_call.1} parent=5 // pred_check
        _
      $region54: #{tpu_custom_call.1} parent=5 // pred_check_branch
        %300 = sbr.rel (%p297) target = $region56
      $region55: #{tpu_custom_call.1} parent=5 // pred_region
        %s301 = ssub.s32 %s18, 1
        %s302 = smul.u32 4, %s23
        %p303 = scmp.lt.s32.totalorder %s302, 7
        %s304 = scalar_select %p303, %s302, 7
        %s305 = scalar_lea.vmem %s0, %s304
        %p306 = pneg %p44
        %p307 = pneg %p41
        %s308 = smul.u32 64, %s23
        %p309 = scmp.lt.s32.totalorder %s308, 127
        %s310 = scalar_select %p309, %s308, 127
        %s311 = smul.addr %s310, 4
        %s312 = scalar_lea.vmem %s1, %s311
        %p313 = pneg %p70
        %p314 = pneg %p67
        %p315 = pneg %p91
        %p316 = pneg %p88
        %p317 = pneg %p112
        %p318 = pneg %p109
        %p319 = pneg %p133
        %p320 = pneg %p130
        %p321 = pneg %p154
        %p322 = pneg %p151
        %p323 = pneg %p175
        %p324 = pneg %p172
        %p325 = pneg %p196
        %p326 = pneg %p193
        %p327 = pneg %p217
        %p328 = pneg %p214
        %p329 = pneg %p238
        %p330 = pneg %p235
        %s331 = smul.u32 4, %s23
        %p332 = scmp.lt.s32.totalorder %s331, 7
        %s333 = scalar_select %p332, %s331, 7
        %s334 = scalar_lea.vmem %s0, %s333
        %s335 = smul.u32 4, %s23
        %s336 = smul.u32 64, %s23
        %p337 = scmp.lt.s32.totalorder %s336, 127
        %s338 = scalar_select %p337, %s336, 127
        %s339 = smul.addr %s338, 4
        %s340 = scalar_lea.vmem %s1, %s339
        %s341 = smul.u32 64, %s23
        %p343 = scmp.eq.s32.totalorder %s23, 0
        // Predicated region
        $region57: #{tpu_custom_call.1} parent=55 // pred_check
          %p344 = pneg %p343
        $region58: #{tpu_custom_call.1} parent=55 // pred_check_branch
          %346 = sbr.rel (%p344) target = $region60
        $region59: #{tpu_custom_call.1} parent=55 // pred_region
          %vm347 = vcmask 254976
          %348 = vst.msk [vmem:[#allocation2] sm:$0x3] %vm347, 0.0
        $region60: #{tpu_custom_call.1} parent=55 // pred_fallthru
          _
        %v349 = vld [vmem:[#allocation2] sm:$0x3]
        %v350 = vld [vmem:[%s334] sm:$0xf]
        %v351 = vld [vmem:[%s340] sm:$0xf]
        %v352 = vld [vmem:[%s340 + $0x4] sm:$0xf]
        %v353 = vld [vmem:[%s340 + $0x8] sm:$0xf]
        %v354 = vld [vmem:[%s340 + $0xc] sm:$0xf]
        %v355 = vld [vmem:[%s340 + $0x10] sm:$0xf]
        %v356 = vld [vmem:[%s340 + $0x14] sm:$0xf]
        %v357 = vld [vmem:[%s340 + $0x18] sm:$0xf]
        %v358 = vld [vmem:[%s340 + $0x1c] sm:$0xf]
        %v359 = vld [vmem:[%s340 + $0x20] sm:$0xf]
        %v360 = vld [vmem:[%s340 + $0x24] sm:$0xf]
        %v361 = vld [vmem:[%s340 + $0x28] sm:$0xf]
        %v362 = vld [vmem:[%s340 + $0x2c] sm:$0xf]
        %v363 = vld [vmem:[%s340 + $0x30] sm:$0xf]
        %v364 = vld [vmem:[%s340 + $0x34] sm:$0xf]
        %v365 = vld [vmem:[%s340 + $0x38] sm:$0xf]
        %v366 = vld [vmem:[%s340 + $0x3c] sm:$0xf]
        %v367 = vld [vmem:[%s340 + $0x40] sm:$0xf]
        %v368 = vld [vmem:[%s340 + $0x44] sm:$0xf]
        %v369 = vld [vmem:[%s340 + $0x48] sm:$0xf]
        %v370 = vld [vmem:[%s340 + $0x4c] sm:$0xf]
        %v371 = vld [vmem:[%s340 + $0x50] sm:$0xf]
        %v372 = vld [vmem:[%s340 + $0x54] sm:$0xf]
        %v373 = vld [vmem:[%s340 + $0x58] sm:$0xf]
        %v374 = vld [vmem:[%s340 + $0x5c] sm:$0xf]
        %v375 = vld [vmem:[%s340 + $0x60] sm:$0xf]
        %v376 = vld [vmem:[%s340 + $0x64] sm:$0xf]
        %v377 = vld [vmem:[%s340 + $0x68] sm:$0xf]
        %v378 = vld [vmem:[%s340 + $0x6c] sm:$0xf]
        %v379 = vld [vmem:[%s340 + $0x70] sm:$0xf]
        %v380 = vld [vmem:[%s340 + $0x74] sm:$0xf]
        %v381 = vld [vmem:[%s340 + $0x78] sm:$0xf]
        %v382 = vld [vmem:[%s340 + $0x7c] sm:$0xf]
        %v383 = vld [vmem:[%s340 + $0x80] sm:$0xf]
        %v384 = vld [vmem:[%s340 + $0x84] sm:$0xf]
        %v385 = vld [vmem:[%s340 + $0x88] sm:$0xf]
        %v386 = vld [vmem:[%s340 + $0x8c] sm:$0xf]
        %v387 = vld [vmem:[%s340 + $0x90] sm:$0xf]
        %v388 = vld [vmem:[%s340 + $0x94] sm:$0xf]
        %v389 = vld [vmem:[%s340 + $0x98] sm:$0xf]
        %v390 = vld [vmem:[%s340 + $0x9c] sm:$0xf]
        %v391 = vld [vmem:[%s340 + $0xa0] sm:$0xf]
        %v392 = vld [vmem:[%s340 + $0xa4] sm:$0xf]
        %v393 = vld [vmem:[%s340 + $0xa8] sm:$0xf]
        %v394 = vld [vmem:[%s340 + $0xac] sm:$0xf]
        %v395 = vld [vmem:[%s340 + $0xb0] sm:$0xf]
        %v396 = vld [vmem:[%s340 + $0xb4] sm:$0xf]
        %v397 = vld [vmem:[%s340 + $0xb8] sm:$0xf]
        %v398 = vld [vmem:[%s340 + $0xbc] sm:$0xf]
        %v399 = vld [vmem:[%s340 + $0xc0] sm:$0xf]
        %v400 = vld [vmem:[%s340 + $0xc4] sm:$0xf]
        %v401 = vld [vmem:[%s340 + $0xc8] sm:$0xf]
        %v402 = vld [vmem:[%s340 + $0xcc] sm:$0xf]
        %v403 = vld [vmem:[%s340 + $0xd0] sm:$0xf]
        %v404 = vld [vmem:[%s340 + $0xd4] sm:$0xf]
        %v405 = vld [vmem:[%s340 + $0xd8] sm:$0xf]
        %v406 = vld [vmem:[%s340 + $0xdc] sm:$0xf]
        %v407 = vld [vmem:[%s340 + $0xe0] sm:$0xf]
        %v408 = vld [vmem:[%s340 + $0xe4] sm:$0xf]
        %v409 = vld [vmem:[%s340 + $0xe8] sm:$0xf]
        %v410 = vld [vmem:[%s340 + $0xec] sm:$0xf]
        %v411 = vld [vmem:[%s340 + $0xf0] sm:$0xf]
        %v412 = vld [vmem:[%s340 + $0xf4] sm:$0xf]
        %v413 = vld [vmem:[%s340 + $0xf8] sm:$0xf]
        %v414 = vld [vmem:[%s340 + $0xfc] sm:$0xf]
        %v417 = vunpack.c.l.s4 1966171168
        %v418 = vunpack.c.0.s8 %v417
        %v419 = vlaneseq
        %v420 = vshrl.u32 %v419, 7
        %v421 = vsub.s32 %v418, %v420
        %v422 = vrot.slane %v350, %v421
        %v423 = vcombine.high %v422, %v422
        %v425 = vunpack.c.l.s4 1966171168
        %v426 = vunpack.c.0.s8 %v425
        %v427 = vlaneseq
        %v428 = vshrl.u32 %v427, 7
        %v429 = vsub.s32 %v426, %v428
        %v430 = vrot.slane %v422, %v429
        %v432 = vunpack.c.l.s4 1966171168
        %v433 = vunpack.c.0.s8 %v432
        %v434 = vlaneseq
        %v435 = vshrl.u32 %v434, 7
        %v436 = vsub.s32 %v433, %v435
        %v437 = vrot.slane %v423, %v436
        %v438 = vcombine.high %v430, %v430
        %v439 = vcombine.high %v437, %v437
        %v508 = vunpack.c.l.b16 %v351
        %v509 = vunpack.c.l.b16 %v352
        %v510 = vunpack.c.l.b16 %v353
        %v511 = vunpack.c.l.b16 %v354
        %v512 = vunpack.c.l.b16 %v355
        %v513 = vunpack.c.l.b16 %v356
        %v514 = vunpack.c.l.b16 %v357
        %v515 = vunpack.c.l.b16 %v358
        %v516 = vunpack.c.l.b16 %v359
        %v517 = vunpack.c.l.b16 %v360
        %v518 = vunpack.c.l.b16 %v361
        %v519 = vunpack.c.l.b16 %v362
        %v520 = vunpack.c.l.b16 %v363
        %v521 = vunpack.c.l.b16 %v364
        %v522 = vunpack.c.l.b16 %v365
        %v523 = vunpack.c.l.b16 %v366
        %v524 = vunpack.c.l.b16 %v367
        %v525 = vunpack.c.l.b16 %v368
        %v526 = vunpack.c.l.b16 %v369
        %v527 = vunpack.c.l.b16 %v370
        %v528 = vunpack.c.l.b16 %v371
        %v529 = vunpack.c.l.b16 %v372
        %v530 = vunpack.c.l.b16 %v373
        %v531 = vunpack.c.l.b16 %v374
        %v532 = vunpack.c.l.b16 %v375
        %v533 = vunpack.c.l.b16 %v376
        %v534 = vunpack.c.l.b16 %v377
        %v535 = vunpack.c.l.b16 %v378
        %v536 = vunpack.c.l.b16 %v379
        %v537 = vunpack.c.l.b16 %v380
        %v538 = vunpack.c.l.b16 %v381
        %v539 = vunpack.c.l.b16 %v382
        %v540 = vunpack.c.l.b16 %v383
        %v541 = vunpack.c.l.b16 %v384
        %v542 = vunpack.c.l.b16 %v385
        %v543 = vunpack.c.l.b16 %v386
        %v544 = vunpack.c.l.b16 %v387
        %v545 = vunpack.c.l.b16 %v388
        %v546 = vunpack.c.l.b16 %v389
        %v547 = vunpack.c.l.b16 %v390
        %v548 = vunpack.c.l.b16 %v391
        %v549 = vunpack.c.l.b16 %v392
        %v550 = vunpack.c.l.b16 %v393
        %v551 = vunpack.c.l.b16 %v394
        %v552 = vunpack.c.l.b16 %v395
        %v553 = vunpack.c.l.b16 %v396
        %v554 = vunpack.c.l.b16 %v397
        %v555 = vunpack.c.l.b16 %v398
        %v556 = vunpack.c.l.b16 %v399
        %v557 = vunpack.c.l.b16 %v400
        %v558 = vunpack.c.l.b16 %v401
        %v559 = vunpack.c.l.b16 %v402
        %v560 = vunpack.c.l.b16 %v403
        %v561 = vunpack.c.l.b16 %v404
        %v562 = vunpack.c.l.b16 %v405
        %v563 = vunpack.c.l.b16 %v406
        %v564 = vunpack.c.l.b16 %v407
        %v565 = vunpack.c.l.b16 %v408
        %v566 = vunpack.c.l.b16 %v409
        %v567 = vunpack.c.l.b16 %v410
        %v568 = vunpack.c.l.b16 %v411
        %v569 = vunpack.c.l.b16 %v412
        %v570 = vunpack.c.l.b16 %v413
        %v571 = vunpack.c.l.b16 %v414
        %v572 = vpack.c.b16 %v509, %v508
        %v573 = vpack.c.b16 %v511, %v510
        %v574 = vpack.c.b16 %v513, %v512
        %v575 = vpack.c.b16 %v515, %v514
        %v576 = vpack.c.b16 %v517, %v516
        %v577 = vpack.c.b16 %v519, %v518
        %v578 = vpack.c.b16 %v521, %v520
        %v579 = vpack.c.b16 %v523, %v522
        %v580 = vpack.c.b16 %v525, %v524
        %v581 = vpack.c.b16 %v527, %v526
        %v582 = vpack.c.b16 %v529, %v528
        %v583 = vpack.c.b16 %v531, %v530
        %v584 = vpack.c.b16 %v533, %v532
        %v585 = vpack.c.b16 %v535, %v534
        %v586 = vpack.c.b16 %v537, %v536
        %v587 = vpack.c.b16 %v539, %v538
        %v588 = vpack.c.b16 %v541, %v540
        %v589 = vpack.c.b16 %v543, %v542
        %v590 = vpack.c.b16 %v545, %v544
        %v591 = vpack.c.b16 %v547, %v546
        %v592 = vpack.c.b16 %v549, %v548
        %v593 = vpack.c.b16 %v551, %v550
        %v594 = vpack.c.b16 %v553, %v552
        %v595 = vpack.c.b16 %v555, %v554
        %v596 = vpack.c.b16 %v557, %v556
        %v597 = vpack.c.b16 %v559, %v558
        %v598 = vpack.c.b16 %v561, %v560
        %v599 = vpack.c.b16 %v563, %v562
        %v600 = vpack.c.b16 %v565, %v564
        %v601 = vpack.c.b16 %v567, %v566
        %v602 = vpack.c.b16 %v569, %v568
        %v603 = vpack.c.b16 %v571, %v570
        %636 = vmatprep.subr.bf16.mxu0 0
        %637 = vmatpush1.bf16.msra.mxu0 %v579
        %638 = vmatprep.subr.bf16.mxu0 0
        %639 = vmatpush1.bf16.msra.mxu0 %v578
        %640 = vmatprep.subr.bf16.mxu0 0
        %641 = vmatpush1.bf16.msra.mxu0 %v577
        %642 = vmatprep.subr.bf16.mxu0 0
        %643 = vmatpush1.bf16.msra.mxu0 %v576
        %644 = vmatprep.subr.bf16.mxu0 0
        %645 = vmatpush1.bf16.msra.mxu0 %v575
        %646 = vmatprep.subr.bf16.mxu0 0
        %647 = vmatpush1.bf16.msra.mxu0 %v574
        %648 = vmatprep.subr.bf16.mxu0 0
        %649 = vmatpush1.bf16.msra.mxu0 %v573
        %650 = vmatprep.subr.bf16.mxu0 0
        %651 = vmatpush1.bf16.msra.mxu0 %v572
        %652 = vmatprep.subr.bf16.mxu0 0
        %653 = vmatpush2.bf16.msra.mxu0 %v587
        %654 = vmatprep.subr.bf16.mxu0 0
        %655 = vmatpush2.bf16.msra.mxu0 %v586
        %656 = vmatprep.subr.bf16.mxu0 0
        %657 = vmatpush2.bf16.msra.mxu0 %v585
        %658 = vmatprep.subr.bf16.mxu0 0
        %659 = vmatpush2.bf16.msra.mxu0 %v584
        %660 = vmatprep.subr.bf16.mxu0 0
        %661 = vmatpush2.bf16.msra.mxu0 %v583
        %662 = vmatprep.subr.bf16.mxu0 0
        %663 = vmatpush2.bf16.msra.mxu0 %v582
        %664 = vmatprep.subr.bf16.mxu0 0
        %665 = vmatpush2.bf16.msra.mxu0 %v581
        %666 = vmatprep.subr.bf16.mxu0 0
        %667 = vmatpush2.bf16.msra.mxu0 %v580
        %668 = vmatprep.mubr.bf16.mxu0 %v437
        %669 = vmatmul.mubr.bf16.gmra.mxu0 %v430
        %v670 = vpop.f32.mrf.mxu0
        %v671 = vadd.f32 0.0, %v670
        %v672 = vpop.f32.mrf.mxu0
        %v673 = vpop.f32.mrf.mxu0
        %v674 = vpop.f32.mrf.mxu0
        %675 = vdwg.mxu0
        %676 = vmatprep.subr.bf16.mxu0 0
        %677 = vmatpush1.bf16.msra.mxu0 %v595
        %678 = vmatprep.subr.bf16.mxu0 0
        %679 = vmatpush1.bf16.msra.mxu0 %v594
        %680 = vmatprep.subr.bf16.mxu0 0
        %681 = vmatpush1.bf16.msra.mxu0 %v593
        %682 = vmatprep.subr.bf16.mxu0 0
        %683 = vmatpush1.bf16.msra.mxu0 %v592
        %684 = vmatprep.subr.bf16.mxu0 0
        %685 = vmatpush1.bf16.msra.mxu0 %v591
        %686 = vmatprep.subr.bf16.mxu0 0
        %687 = vmatpush1.bf16.msra.mxu0 %v590
        %688 = vmatprep.subr.bf16.mxu0 0
        %689 = vmatpush1.bf16.msra.mxu0 %v589
        %690 = vmatprep.subr.bf16.mxu0 0
        %691 = vmatpush1.bf16.msra.mxu0 %v588
        %692 = vmatprep.subr.bf16.mxu0 0
        %693 = vmatpush2.bf16.msra.mxu0 %v603
        %694 = vmatprep.subr.bf16.mxu0 0
        %695 = vmatpush2.bf16.msra.mxu0 %v602
        %696 = vmatprep.subr.bf16.mxu0 0
        %697 = vmatpush2.bf16.msra.mxu0 %v601
        %698 = vmatprep.subr.bf16.mxu0 0
        %699 = vmatpush2.bf16.msra.mxu0 %v600
        %700 = vmatprep.subr.bf16.mxu0 0
        %701 = vmatpush2.bf16.msra.mxu0 %v599
        %702 = vmatprep.subr.bf16.mxu0 0
        %703 = vmatpush2.bf16.msra.mxu0 %v598
        %704 = vmatprep.subr.bf16.mxu0 0
        %705 = vmatpush2.bf16.msra.mxu0 %v597
        %706 = vmatprep.subr.bf16.mxu0 0
        %707 = vmatpush2.bf16.msra.mxu0 %v596
        %708 = vmatprep.mubr.bf16.mxu0 %v439
        %709 = vmatmul.mubr.bf16.gmra.mxu0 %v438
        %v710 = vpop.f32.mrf.mxu0
        %v711 = vadd.f32 %v671, %v710
        %v712 = vpop.f32.mrf.mxu0
        %v713 = vpop.f32.mrf.mxu0
        %v714 = vpop.f32.mrf.mxu0
        %715 = vdwg.mxu0
        %v716 = vadd.f32 %v349, %v711
        %vm717 = vcmask 254976
        %718 = vst.msk [vmem:[#allocation2] sm:$0x3] %vm717, %v716
        %p719 = scmp.eq.s32.totalorder %s23, 1
        // Predicated region
        $region61: #{tpu_custom_call.1} parent=55 // pred_check
          %p720 = pneg %p719
        $region62: #{tpu_custom_call.1} parent=55 // pred_check_branch
          %722 = sbr.rel (%p720) target = $region64
        $region63: #{tpu_custom_call.1} parent=55 // pred_region
          %s723 = sld [smem:[#allocation3]]
          %s724 = sld [smem:[#allocation4]]
          %v725 = vld [vmem:[#allocation2] sm:$0x3]
          %v726 = vld [vmem:[%s2] sm:$0x1]
          %v728 = vlaneseq
          %v729 = vshrl.u32 %v728, 7
          %v730 = vsub.s32 0, %v729
          %v731 = vrot.slane %v726, %v730
          %v733 = vadd.f32 %v725, %v731
          %vm734 = vcmp.gt.f32.partialorder %v733, 0.0
          %v735 = vstv %s723
          %v736 = vmul.f32 %v735, %v733
          %v737 = vsel %vm734, %v733, %v736
          %v738 = vxor.u32 %v737, 2147483648
          %v739 = vmul.f32 %v738, 1.442695
          %v740 = vpow.pop %v739
          %v741 = vadd.f32 %v740, 1.0
          %v742 = vrcp.pop %v741
          %v743 = vmul.f32 1.0, %v742
          %v744 = vld [vmem:[%s3] sm:$0xff]
          %v745 = vld [vmem:[%s3 + $0x8] sm:$0xff]
          %v746 = vld [vmem:[%s3 + $0x10] sm:$0xff]
          %v747 = vld [vmem:[%s3 + $0x18] sm:$0xff]
          %v748 = vld [vmem:[%s4] sm:$0x1]
          %v750 = vlaneseq
          %v751 = vshrl.u32 %v750, 7
          %v752 = vsub.s32 0, %v751
          %v753 = vrot.slane %v748, %v752
          %vm755 = vcmask 261120
          %v757 = vsel %vm755, %v743, 0
          %759 = vmatprep.subr.mxu0 0.0
          %760 = vmatpush1.msra.mxu0 0.0
          %761 = vmatprep.subr.mxu0 0.0
          %762 = vmatpush1.msra.mxu0 0.0
          %763 = vmatprep.subr.mxu0 0.0
          %764 = vmatpush1.msra.mxu0 0.0
          %765 = vmatprep.subr.mxu0 0.0
          %766 = vmatpush1.msra.mxu0 0.0
          %767 = vmatprep.subr.mxu0 0.0
          %768 = vmatpush1.msra.mxu0 0.0
          %769 = vmatprep.subr.mxu0 0.0
          %770 = vmatpush1.msra.mxu0 0.0
          %771 = vmatprep.subr.mxu0 0.0
          %772 = vmatpush1.msra.mxu0 0.0
          %773 = vmatprep.subr.mxu0 0.0
          %774 = vmatpush1.msra.mxu0 0.0
          %775 = vmatprep.subr.mxu0 0.0
          %776 = vmatpush1.msra.mxu0 0.0
          %777 = vmatprep.subr.mxu0 0.0
          %778 = vmatpush1.msra.mxu0 0.0
          %779 = vmatprep.subr.mxu0 0.0
          %780 = vmatpush1.msra.mxu0 0.0
          %781 = vmatprep.subr.mxu0 0.0
          %782 = vmatpush1.msra.mxu0 0.0
          %783 = vmatprep.subr.mxu0 0.0
          %784 = vmatpush1.msra.mxu0 %v747
          %785 = vmatprep.subr.mxu0 0.0
          %786 = vmatpush1.msra.mxu0 %v746
          %787 = vmatprep.subr.mxu0 0.0
          %788 = vmatpush1.msra.mxu0 %v745
          %789 = vmatprep.subr.mxu0 0.0
          %790 = vmatpush1.msra.mxu0 %v744
          %791 = vmatprep.subr.mxu0 0.0
          %792 = vmatpush2.msra.mxu0 0.0
          %793 = vmatprep.subr.mxu0 0.0
          %794 = vmatpush2.msra.mxu0 0.0
          %795 = vmatprep.subr.mxu0 0.0
          %796 = vmatpush2.msra.mxu0 0.0
          %797 = vmatprep.subr.mxu0 0.0
          %798 = vmatpush2.msra.mxu0 0.0
          %799 = vmatprep.subr.mxu0 0.0
          %800 = vmatpush2.msra.mxu0 0.0
          %801 = vmatprep.subr.mxu0 0.0
          %802 = vmatpush2.msra.mxu0 0.0
          %803 = vmatprep.subr.mxu0 0.0
          %804 = vmatpush2.msra.mxu0 0.0
          %805 = vmatprep.subr.mxu0 0.0
          %806 = vmatpush2.msra.mxu0 0.0
          %807 = vmatprep.subr.mxu0 0.0
          %808 = vmatpush2.msra.mxu0 0.0
          %809 = vmatprep.subr.mxu0 0.0
          %810 = vmatpush2.msra.mxu0 0.0
          %811 = vmatprep.subr.mxu0 0.0
          %812 = vmatpush2.msra.mxu0 0.0
          %813 = vmatprep.subr.mxu0 0.0
          %814 = vmatpush2.msra.mxu0 0.0
          %815 = vmatprep.subr.mxu0 0.0
          %816 = vmatpush2.msra.mxu0 0.0
          %817 = vmatprep.subr.mxu0 0.0
          %818 = vmatpush2.msra.mxu0 0.0
          %819 = vmatprep.subr.mxu0 0.0
          %820 = vmatpush2.msra.mxu0 0.0
          %821 = vmatprep.subr.mxu0 0.0
          %822 = vmatpush2.msra.mxu0 0.0
          %823 = vmatprep.mubr.f32.mxu0 0.0
          %824 = vmatmul.mubr.f32.gmra.mxu0 %v757
          %v825 = vpop.f32.mrf.mxu0
          %v826 = vadd.f32 %v753, %v825
          %v827 = vpop.f32.mrf.mxu0
          %828 = vdwg.mxu0
          %vm829 = vcmp.gt.f32.partialorder %v826, 0.0
          %v830 = vstv %s724
          %v831 = vmul.f32 %v830, %v826
          %v832 = vsel %vm829, %v826, %v831
          %v833 = vld [vmem:[%s5] sm:$0xff]
          %v834 = vld [vmem:[%s5 + $0x8] sm:$0xff]
          %v835 = vld [vmem:[%s5 + $0x10] sm:$0xff]
          %v836 = vld [vmem:[%s5 + $0x18] sm:$0xff]
          %v837 = vld [vmem:[%s6] sm:$0x1]
          %v839 = vlaneseq
          %v840 = vshrl.u32 %v839, 7
          %v841 = vsub.s32 0, %v840
          %v842 = vrot.slane %v837, %v841
          %v845 = vsel %vm755, %v832, 0
          %847 = vmatprep.subr.mxu0 0.0
          %848 = vmatpush1.msra.mxu0 0.0
          %849 = vmatprep.subr.mxu0 0.0
          %850 = vmatpush1.msra.mxu0 0.0
          %851 = vmatprep.subr.mxu0 0.0
          %852 = vmatpush1.msra.mxu0 0.0
          %853 = vmatprep.subr.mxu0 0.0
          %854 = vmatpush1.msra.mxu0 0.0
          %855 = vmatprep.subr.mxu0 0.0
          %856 = vmatpush1.msra.mxu0 0.0
          %857 = vmatprep.subr.mxu0 0.0
          %858 = vmatpush1.msra.mxu0 0.0
          %859 = vmatprep.subr.mxu0 0.0
          %860 = vmatpush1.msra.mxu0 0.0
          %861 = vmatprep.subr.mxu0 0.0
          %862 = vmatpush1.msra.mxu0 0.0
          %863 = vmatprep.subr.mxu0 0.0
          %864 = vmatpush1.msra.mxu0 0.0
          %865 = vmatprep.subr.mxu0 0.0
          %866 = vmatpush1.msra.mxu0 0.0
          %867 = vmatprep.subr.mxu0 0.0
          %868 = vmatpush1.msra.mxu0 0.0
          %869 = vmatprep.subr.mxu0 0.0
          %870 = vmatpush1.msra.mxu0 0.0
          %871 = vmatprep.subr.mxu0 0.0
          %872 = vmatpush1.msra.mxu0 %v836
          %873 = vmatprep.subr.mxu0 0.0
          %874 = vmatpush1.msra.mxu0 %v835
          %875 = vmatprep.subr.mxu0 0.0
          %876 = vmatpush1.msra.mxu0 %v834
          %877 = vmatprep.subr.mxu0 0.0
          %878 = vmatpush1.msra.mxu0 %v833
          %879 = vmatprep.subr.mxu0 0.0
          %880 = vmatpush2.msra.mxu0 0.0
          %881 = vmatprep.subr.mxu0 0.0
          %882 = vmatpush2.msra.mxu0 0.0
          %883 = vmatprep.subr.mxu0 0.0
          %884 = vmatpush2.msra.mxu0 0.0
          %885 = vmatprep.subr.mxu0 0.0
          %886 = vmatpush2.msra.mxu0 0.0
          %887 = vmatprep.subr.mxu0 0.0
          %888 = vmatpush2.msra.mxu0 0.0
          %889 = vmatprep.subr.mxu0 0.0
          %890 = vmatpush2.msra.mxu0 0.0
          %891 = vmatprep.subr.mxu0 0.0
          %892 = vmatpush2.msra.mxu0 0.0
          %893 = vmatprep.subr.mxu0 0.0
          %894 = vmatpush2.msra.mxu0 0.0
          %895 = vmatprep.subr.mxu0 0.0
          %896 = vmatpush2.msra.mxu0 0.0
          %897 = vmatprep.subr.mxu0 0.0
          %898 = vmatpush2.msra.mxu0 0.0
          %899 = vmatprep.subr.mxu0 0.0
          %900 = vmatpush2.msra.mxu0 0.0
          %901 = vmatprep.subr.mxu0 0.0
          %902 = vmatpush2.msra.mxu0 0.0
          %903 = vmatprep.subr.mxu0 0.0
          %904 = vmatpush2.msra.mxu0 0.0
          %905 = vmatprep.subr.mxu0 0.0
          %906 = vmatpush2.msra.mxu0 0.0
          %907 = vmatprep.subr.mxu0 0.0
          %908 = vmatpush2.msra.mxu0 0.0
          %909 = vmatprep.subr.mxu0 0.0
          %910 = vmatpush2.msra.mxu0 0.0
          %911 = vmatprep.mubr.f32.mxu0 0.0
          %912 = vmatmul.mubr.f32.gmra.mxu0 %v845
          %v913 = vpop.f32.mrf.mxu0
          %v914 = vadd.f32 %v842, %v913
          %v915 = vpop.f32.mrf.mxu0
          %916 = vdwg.mxu0
          %917 = vst [vmem:[#allocation5] sm:$0x3] %v914
        $region64: #{tpu_custom_call.1} parent=55 // pred_fallthru
          _
        // Predicated region
        $region65: #{tpu_custom_call.1} parent=55 // pred_check
          %p918 = pneg %p235
        $region66: #{tpu_custom_call.1} parent=55 // pred_check_branch
          %920 = sbr.rel (%p918) target = $region68
        $region67: #{tpu_custom_call.1} parent=55 // pred_region
          %s922 = ssub.s32 32, 32
          %923 = vsyncadd [#allocation6], %s922
          %s925 = sshll.u32 [#allocation5], 4
          %s926 = int_to_ptr.vmem [resolvable:$true] %s925
          %928 = dma.vmem_to_hbm [thread:$0]  %s926, 32, %s9, [#allocation6]
        $region68: #{tpu_custom_call.1} parent=55 // pred_fallthru
          _
        // Predicated region
        $region69: #{tpu_custom_call.1} parent=55 // pred_check
          %p929 = pneg %p235
        $region70: #{tpu_custom_call.1} parent=55 // pred_check_branch
          %931 = sbr.rel (%p929) target = $region72
        $region71: #{tpu_custom_call.1} parent=55 // pred_region
          %932 = dma.done [#allocation6], 32
        $region72: #{tpu_custom_call.1} parent=55 // pred_fallthru
          _
      $region56: #{tpu_custom_call.1} parent=5 // pred_fallthru
        _
      %p933 = scmp.le.s32.totalorder 2, %s18
      // Predicated region
      $region73: #{tpu_custom_call.1} parent=5 // pred_check
        %p934 = pneg %p933
      $region74: #{tpu_custom_call.1} parent=5 // pred_check_branch
        %936 = sbr.rel (%p934) target = $region76
      $region75: #{tpu_custom_call.1} parent=5 // pred_region
        %s937 = ssub.s32 %s18, 2
      $region76: #{tpu_custom_call.1} parent=5 // pred_fallthru
        _
    $region6: #{tpu_custom_call.1} parent=1 // loop_footer
      %s22 = sadd.s32 1, %s18
    $region7: #{tpu_custom_call.1} parent=1 // loop_footer_branch
      %17 = sbr.rel target = $region3
    $region8: #{tpu_custom_call.1} parent=1 // loop_exit
      _
    %938 = vsyncpa [#allocation6], 1
    %s939 = scalar_lea.sflag [#allocation6], 1
    %940 = vsyncpa %s939, 1

</llo_original>
